<compile_context>
chip_gen: v7x
topology: tpu7x:2x2x1
jax: 0.10.0
libtpu: 0.0.40
codegen_flags: <defaults>
</compile_context>

<pallas_src>
import math

import jax
import jax.numpy as jnp
from jax.experimental import pallas as pl
from jax.experimental.pallas import tpu as pltpu


def _round_up(n, m):
    return ((n + m - 1) // m) * m


def _plan_tiles(K, H, weight_itemsize=4):
    """Padded sizes, hidden-tile width tn, tile count, and vmem limit.

    Deterministic given (K, H, weight dtype) so the init-time packer and the
    per-call forward agree on the layout.
    """
    Kp = _round_up(K, 128)
    Hp = _round_up(H, 128)
    C = Kp + Hp

    # Generation-aware budgets (v7x has 64 MiB VMEM / 2 TCs; v5e/v6e 128 MiB).
    try:
        info = pltpu.get_tpu_info()
        vmem_cap = int(getattr(info, "vmem_capacity_bytes", 64 * 1024 * 1024))
    except Exception:
        vmem_cap = 64 * 1024 * 1024  # conservative default (v7x-sized)
    small_vmem = vmem_cap <= 64 * 1024 * 1024
    if small_vmem:
        weight_budget = 36 * 1024 * 1024
        vmem_limit = 48 * 1024 * 1024
        want_two_tiles = True            # let the 2 v7x TCs split the hidden axis
    else:
        weight_budget = 88 * 1024 * 1024
        vmem_limit = 100 * 1024 * 1024
        want_two_tiles = False

    m = Hp // 128
    best_d = 1
    for d in range(m, 0, -1):
        if m % d != 0:
            continue
        tn = 128 * d
        n_tiles = Hp // tn
        if want_two_tiles and Hp >= 256 and n_tiles < 2:
            continue
        # Double-buffered fused weight tile is the dominant VMEM consumer.
        w_bytes = 2 * C * (4 * tn) * weight_itemsize
        if w_bytes <= weight_budget:
            best_d = d
            break
    tn = 128 * best_d
    return Kp, Hp, tn, Hp // tn, vmem_limit


def pack_lstm_params(Wx, Wh, b, weight_dtype=jnp.float32):
    """One-time packing of gate-major params into the fused, pre-padded layout.

    Args:
      Wx: (4, K, H) input weights, gate order [i | f | g | o]
      Wh: (4, H, H) recurrent weights
      b : (4, H) or (4, 1, H) biases
      weight_dtype: jnp.float32 (exact) or jnp.bfloat16 (fast path, ~2x less
        weight HBM traffic; MXU accumulates in f32 either way).
    Returns:
      W_packed: (Kp+Hp, 4*Hp), columns grouped per hidden tile as [i|f|g|o]
      b_packed: (1, 4*Hp) float32, same column layout
    """
    _, K, H = Wx.shape
    itemsize = jnp.dtype(weight_dtype).itemsize
    Kp, Hp, tn, n_tiles, _ = _plan_tiles(K, H, itemsize)
    C = Kp + Hp

    Wx_p = jnp.pad(Wx, ((0, 0), (0, Kp - K), (0, Hp - H)))
    Wh_p = jnp.pad(Wh, ((0, 0), (0, Hp - H), (0, Hp - H)))
    b_p = jnp.pad(jnp.reshape(b, (4, 1, H)), ((0, 0), (0, 0), (0, Hp - H)))

    W = jnp.concatenate([Wx_p, Wh_p], axis=1)           # (4, C, Hp)
    W = W.reshape(4, C, n_tiles, tn)
    W = jnp.transpose(W, (1, 2, 0, 3)).reshape(C, n_tiles * 4 * tn)

    b_packed = b_p.reshape(4, 1, n_tiles, tn)
    b_packed = jnp.transpose(b_packed, (1, 2, 0, 3)).reshape(1, n_tiles * 4 * tn)

    return W.astype(weight_dtype), b_packed.astype(jnp.float32)


def _lstm_fused_kernel(xh_ref, w_ref, b_ref, c_ref, h_out_ref, c_out_ref):
    # Per hidden tile of width tn:
    #   xh_ref: (Bp, C)      w_ref: (C, 4*tn)    b_ref: (1, 4*tn)
    #   c_ref / h_out_ref / c_out_ref: (Bp, tn)
    tn = c_ref.shape[-1]

    # One fused MXU matmul per tile; bias folded in with one broadcast add.
    preact = jnp.dot(xh_ref[...], w_ref[...],
                     preferred_element_type=jnp.float32) + b_ref[...]

    # 128-aligned static lane slices: [i | f | g | o].
    i_t = jax.nn.sigmoid(preact[:, 0 * tn:1 * tn])
    f_t = jax.nn.sigmoid(preact[:, 1 * tn:2 * tn])
    g_t = jnp.tanh(preact[:, 2 * tn:3 * tn])
    o_t = jax.nn.sigmoid(preact[:, 3 * tn:4 * tn])

    c = c_ref[...].astype(jnp.float32)
    c_new = f_t * c + i_t * g_t
    h_new = o_t * jnp.tanh(c_new)

    h_out_ref[...] = h_new.astype(h_out_ref.dtype)
    c_out_ref[...] = c_new.astype(c_out_ref.dtype)


def lstm_block_forward(x, h_t, c_t, W_packed, b_packed):
    """Single LSTM cell step with pre-packed weights.

    Args:
      x   : (B, K) inputs
      h_t : (B, H) hidden state
      c_t : (B, H) cell state
      W_packed, b_packed: outputs of pack_lstm_params (packed ONCE at init)
    Returns (h_new, c_new), each (B, H).
    """
    B, K = x.shape
    _, H = h_t.shape
    Kp, Hp, tn, n_tiles, vmem_limit = _plan_tiles(K, H, W_packed.dtype.itemsize)
    C = Kp + Hp
    assert W_packed.shape == (C, 4 * Hp), "weights packed for different K/H/dtype"

    Bp = _round_up(B, 8)
    # Only the tiny activations are padded per call (weights were pre-packed).
    xp = jnp.pad(x.astype(jnp.float32), ((0, Bp - B), (0, Kp - K)))
    hp = jnp.pad(h_t.astype(jnp.float32), ((0, Bp - B), (0, Hp - H)))
    xh = jnp.concatenate([xp, hp], axis=-1)                       # (Bp, C)
    cp = jnp.pad(c_t, ((0, Bp - B), (0, Hp - H)))

    w_bytes = W_packed.dtype.itemsize
    cost = pl.CostEstimate(
        flops=2 * Bp * C * 4 * Hp,
        transcendentals=5 * Bp * Hp,
        bytes_accessed=(w_bytes * W_packed.size + 4 * b_packed.size
                        + 4 * (xh.size + cp.size + 2 * Bp * Hp)),
    )

    h_out_p, c_out_p = pl.pallas_call(
        _lstm_fused_kernel,
        out_shape=(
            jax.ShapeDtypeStruct((Bp, Hp), h_t.dtype),
            jax.ShapeDtypeStruct((Bp, Hp), c_t.dtype),
        ),
        grid=(n_tiles,),
        in_specs=[
            pl.BlockSpec((Bp, C), lambda n: (0, 0)),        # [x | h] (grid-invariant)
            pl.BlockSpec((C, 4 * tn), lambda n: (0, n)),    # fused weight tile
            pl.BlockSpec((1, 4 * tn), lambda n: (0, n)),    # fused bias tile
            pl.BlockSpec((Bp, tn), lambda n: (0, n)),       # c tile
        ],
        out_specs=(
            pl.BlockSpec((Bp, tn), lambda n: (0, n)),
            pl.BlockSpec((Bp, tn), lambda n: (0, n)),
        ),
        compiler_params=pltpu.CompilerParams(
            dimension_semantics=("parallel",),   # hidden tiles are independent
            vmem_limit_bytes=vmem_limit,
        ),
        cost_estimate=cost,
    )(xh, W_packed, b_packed, cp)

    return h_out_p[:B, :H], c_out_p[:B, :H]


def init_lstm_params(key, num_inputs, num_hiddens, dtype=jnp.float32):
    """uniform(-stdv, stdv) init mirroring LSTMBlock.init_weights, gate-major."""
    stdv = 1.0 / math.sqrt(num_hiddens)
    keys = jax.random.split(key, 12)
    u = lambda k, shape: jax.random.uniform(k, shape, dtype, -stdv, stdv)
    # Gate order [i | f | g(c) | o] on the leading axis.
    Wx = jnp.stack([u(keys[i], (num_inputs, num_hiddens)) for i in range(4)])
    Wh = jnp.stack([u(keys[4 + i], (num_hiddens, num_hiddens)) for i in range(4)])
    b = jnp.stack([u(keys[8 + i], (num_hiddens,)) for i in range(4)])
    return Wx, Wh, b


def lstm_block_reference(x, h_t, c_t, wx, wh, b):
    """Pure-JAX reference (matches the PyTorch forward)."""
    i_t = jax.nn.sigmoid(x @ wx[0] + h_t @ wh[0] + b[0])
    f_t = jax.nn.sigmoid(x @ wx[1] + h_t @ wh[1] + b[1])
    g_t = jnp.tanh(x @ wx[2] + h_t @ wh[2] + b[2])
    o_t = jax.nn.sigmoid(x @ wx[3] + h_t @ wh[3] + b[3])
    c_new = f_t * c_t + i_t * g_t
    h_new = o_t * jnp.tanh(c_new)
    return h_new, c_new


if __name__ == "__main__":
    B = 4             # batch
    num_inputs = 16   # input feature dim
    num_hiddens = 32  # hidden dim

    key = jax.random.PRNGKey(0)
    k_x, k_h, k_c, k_p = jax.random.split(key, 4)

    x = jax.random.normal(k_x, (B, num_inputs), jnp.float32)
    h_t = jax.random.normal(k_h, (B, num_hiddens), jnp.float32)
    c_t = jax.random.normal(k_c, (B, num_hiddens), jnp.float32)
    Wx, Wh, b = init_lstm_params(k_p, num_inputs, num_hiddens)

    # One-time weight packing (hoisted out of the forward path).
    W_packed, b_packed = pack_lstm_params(Wx, Wh, b, weight_dtype=jnp.float32)
    W_packed, b_packed = jax.block_until_ready((W_packed, b_packed))

    h_out, c_out = jax.jit(lstm_block_forward)(x, h_t, c_t, W_packed, b_packed)
    jax.block_until_ready((h_out, c_out))

    h_ref, c_ref = lstm_block_reference(x, h_t, c_t, Wx, Wh, b)
    assert h_out.shape == (B, num_hiddens) and c_out.shape == (B, num_hiddens)
    assert jnp.allclose(h_out, h_ref, atol=1e-5, rtol=1e-5), "h_t mismatch"
    assert jnp.allclose(c_out, c_ref, atol=1e-5, rtol=1e-5), "c_t mismatch"

    print("KERNEL_OK")
</pallas_src>

<mosaic_0001>
module attributes {stable_mosaic.version = 11 : i64} {
  func.func @_lstm_fused_kernel(%arg0: i32, %arg1: memref<8x256xf32, #tpu.memory_space<vmem>>, %arg2: memref<256x512xf32, #tpu.memory_space<vmem>>, %arg3: memref<1x512xf32, #tpu.memory_space<vmem>>, %arg4: memref<8x128xf32, #tpu.memory_space<vmem>>, %arg5: memref<8x128xf32, #tpu.memory_space<vmem>>, %arg6: memref<8x128xf32, #tpu.memory_space<vmem>>) attributes {dimension_semantics = [#tpu.dimension_semantics<parallel>], iteration_bounds = array<i64: 1>, scalar_prefetch = 0 : i64, scratch_operands = 0 : i64, tpu.core_type = #tpu.core_type<tc>, window_params = [{pipeline_mode = #tpu.pipeline_mode<synchronous>, transform_indices = @transform_0, window_bounds = array<i64: 8, 256>}, {transform_indices = @transform_1, window_bounds = array<i64: 256, 512>}, {transform_indices = @transform_2, window_bounds = array<i64: 1, 512>}, {transform_indices = @transform_3, window_bounds = array<i64: 8, 128>}, {transform_indices = @transform_4, window_bounds = array<i64: 8, 128>}, {transform_indices = @transform_5, window_bounds = array<i64: 8, 128>}]} {
    %c0 = arith.constant 0 : index
    %c0_0 = arith.constant 0 : index
    %0 = vector.load %arg1[%c0, %c0_0] : memref<8x256xf32, #tpu.memory_space<vmem>>, vector<8x256xf32>
    %c0_1 = arith.constant 0 : index
    %c0_2 = arith.constant 0 : index
    %1 = vector.load %arg2[%c0_1, %c0_2] : memref<256x512xf32, #tpu.memory_space<vmem>>, vector<256x512xf32>
    %cst = arith.constant dense<0.000000e+00> : vector<8x512xf32>
    %2 = tpu.matmul %0, %1, %cst {dimension_numbers = #tpu.dot_dimension_numbers<[1], [0], [0], [1], [0, 0, 1, 1], [], []>} : vector<8x256xf32>, vector<256x512xf32>, vector<8x512xf32> -> vector<8x512xf32>
    %c0_3 = arith.constant 0 : index
    %c0_4 = arith.constant 0 : index
    %3 = vector.load %arg3[%c0_3, %c0_4] : memref<1x512xf32, #tpu.memory_space<vmem>>, vector<1x512xf32>
    %4 = vector.broadcast %3 : vector<1x512xf32> to vector<8x512xf32>
    %5 = arith.addf %2, %4 : vector<8x512xf32>
    %6 = vector.extract_strided_slice %5 {offsets = [0, 0], sizes = [8, 128], strides = [1, 1]} : vector<8x512xf32> to vector<8x128xf32>
    %7 = arith.negf %6 : vector<8x128xf32>
    %8 = math.exp %7 : vector<8x128xf32>
    %cst_5 = arith.constant 1.000000e+00 : f32
    %9 = vector.broadcast %cst_5 : f32 to vector<8x128xf32>
    %10 = arith.addf %9, %8 : vector<8x128xf32>
    %11 = arith.divf %9, %10 : vector<8x128xf32>
    %12 = vector.extract_strided_slice %5 {offsets = [0, 128], sizes = [8, 128], strides = [1, 1]} : vector<8x512xf32> to vector<8x128xf32>
    %13 = arith.negf %12 : vector<8x128xf32>
    %14 = math.exp %13 : vector<8x128xf32>
    %cst_6 = arith.constant 1.000000e+00 : f32
    %15 = vector.broadcast %cst_6 : f32 to vector<8x128xf32>
    %16 = arith.addf %15, %14 : vector<8x128xf32>
    %17 = arith.divf %15, %16 : vector<8x128xf32>
    %18 = vector.extract_strided_slice %5 {offsets = [0, 256], sizes = [8, 128], strides = [1, 1]} : vector<8x512xf32> to vector<8x128xf32>
    %19 = math.tanh %18 : vector<8x128xf32>
    %20 = vector.extract_strided_slice %5 {offsets = [0, 384], sizes = [8, 128], strides = [1, 1]} : vector<8x512xf32> to vector<8x128xf32>
    %21 = arith.negf %20 : vector<8x128xf32>
    %22 = math.exp %21 : vector<8x128xf32>
    %cst_7 = arith.constant 1.000000e+00 : f32
    %23 = vector.broadcast %cst_7 : f32 to vector<8x128xf32>
    %24 = arith.addf %23, %22 : vector<8x128xf32>
    %25 = arith.divf %23, %24 : vector<8x128xf32>
    %c0_8 = arith.constant 0 : index
    %c0_9 = arith.constant 0 : index
    %26 = vector.load %arg4[%c0_8, %c0_9] : memref<8x128xf32, #tpu.memory_space<vmem>>, vector<8x128xf32>
    %27 = arith.mulf %17, %26 : vector<8x128xf32>
    %28 = arith.mulf %11, %19 : vector<8x128xf32>
    %29 = arith.addf %27, %28 : vector<8x128xf32>
    %30 = math.tanh %29 : vector<8x128xf32>
    %31 = arith.mulf %25, %30 : vector<8x128xf32>
    %c0_10 = arith.constant 0 : index
    %c0_11 = arith.constant 0 : index
    %32 = vector.load %arg5[%c0_10, %c0_11] : memref<8x128xf32, #tpu.memory_space<vmem>>, vector<8x128xf32>
    tpu.vector_store %arg5[%c0_10, %c0_11], %31 {strides = array<i32>} : memref<8x128xf32, #tpu.memory_space<vmem>>, vector<8x128xf32>,
    %c0_12 = arith.constant 0 : index
    %c0_13 = arith.constant 0 : index
    %33 = vector.load %arg6[%c0_12, %c0_13] : memref<8x128xf32, #tpu.memory_space<vmem>>, vector<8x128xf32>
    tpu.vector_store %arg6[%c0_12, %c0_13], %29 {strides = array<i32>} : memref<8x128xf32, #tpu.memory_space<vmem>>, vector<8x128xf32>,
    return
  }
  func.func @transform_0(%arg0: i32) -> (i32, i32) {
    %c0_i32 = arith.constant 0 : i32
    %c0_i32_0 = arith.constant 0 : i32
    %c0_i32_1 = arith.constant 0 : i32
    return %c0_i32, %c0_i32_0 : i32, i32
  }
  func.func @transform_1(%arg0: i32) -> (i32, i32) {
    %c0_i32 = arith.constant 0 : i32
    %c0_i32_0 = arith.constant 0 : i32
    return %c0_i32, %arg0 : i32, i32
  }
  func.func @transform_2(%arg0: i32) -> (i32, i32) {
    %c0_i32 = arith.constant 0 : i32
    %c0_i32_0 = arith.constant 0 : i32
    return %c0_i32, %arg0 : i32, i32
  }
  func.func @transform_3(%arg0: i32) -> (i32, i32) {
    %c0_i32 = arith.constant 0 : i32
    %c0_i32_0 = arith.constant 0 : i32
    return %c0_i32, %arg0 : i32, i32
  }
  func.func @transform_4(%arg0: i32) -> (i32, i32) {
    %c0_i32 = arith.constant 0 : i32
    %c0_i32_0 = arith.constant 0 : i32
    return %c0_i32, %arg0 : i32, i32
  }
  func.func @transform_5(%arg0: i32) -> (i32, i32) {
    %c0_i32 = arith.constant 0 : i32
    %c0_i32_0 = arith.constant 0 : i32
    return %c0_i32, %arg0 : i32, i32
  }
}

</mosaic_0001>

<llo_original>
// kernel: lstm_block_forward.1
$region0: #{lstm_block_forward.1}
  #allocation0 [shape = 'u32[]', space=smem, size = 0x4, offset = 0x4, fixed_abs, tag = 'smem constant byte address 0x4 - core index']
  #allocation1 [shape = 'u32[144,128]{1,0:T(1,128)}', space=vmem, size = 0x12000, scoped, tag = 'internal scratch']
  %s0 = inlined_call_operand.vmem [shape: f32[8,256], index: 0, kind: input, shape index: {}]
  %s1 = inlined_call_operand.hbm [shape: f32[256,512], index: 1, kind: input, shape index: {}]
  %s2 = inlined_call_operand.vmem [shape: f32[1,512], index: 2, kind: input, shape index: {}]
  %s3 = inlined_call_operand.vmem [shape: f32[8,128], index: 3, kind: input, shape index: {}]
  %s4 = inlined_call_operand.vmem [shape: f32[8,128], index: 4, kind: output, shape index: {0}]
  %s5 = inlined_call_operand.vmem [shape: f32[8,128], index: 5, kind: output, shape index: {1}]
  %6 = xla_tuple %s4, %s5
  %s7 = sld [smem:[#allocation0]]
  $region38: #{lstm_block_forward.1} parent=0
    _
  %s9 = ssub.s32 1, %s7
  %s10 = scalar_select 0, %s9, %s7
  $region1: #{lstm_block_forward.1} parent=0
    #allocation2 [shape = 'u8[524288]{0}', space=vmem, size = 0x80000, scoped, tag = 'input window, operand 1, single buffered']
    #allocation3 [shape = 's32[1]{0}', space=sflag, size = 0x4, scoped, tag = 'scoped memory for lstm_block_forward.1']
    %11 = vsyncpa [#allocation3], 0
    // Predicated region
    $region2: #{lstm_block_forward.1} parent=1 // pred_check
      _
    $region3: #{lstm_block_forward.1} parent=1 // pred_check_branch
      %13 = sbr.rel (0) target = $region5
    $region4: #{lstm_block_forward.1} parent=1 // pred_region
      _
    $region5: #{lstm_block_forward.1} parent=1 // pred_fallthru
      _
    // Predicated region
    $region6: #{lstm_block_forward.1} parent=1 // pred_check
      _
    $region7: #{lstm_block_forward.1} parent=1 // pred_check_branch
      %15 = sbr.rel (0) target = $region9
    $region8: #{lstm_block_forward.1} parent=1 // pred_region
      %s17 = ssub.s32 16384, 16384
      %18 = vsyncadd [#allocation3], %s17
      %s19 = sshll.u32 [#allocation2], 4
      %s20 = int_to_ptr.vmem [resolvable:$true] %s19
      %25 = dma.hbm_to_vmem [thread:$0]  %s1, 16384, %s20, [#allocation3], 512, 512, 32
    $region9: #{lstm_block_forward.1} parent=1 // pred_fallthru
      _
    // Predicated region
    $region10: #{lstm_block_forward.1} parent=1 // pred_check
      _
    $region11: #{lstm_block_forward.1} parent=1 // pred_check_branch
      %27 = sbr.rel (0) target = $region13
    $region12: #{lstm_block_forward.1} parent=1 // pred_region
      _
    $region13: #{lstm_block_forward.1} parent=1 // pred_fallthru
      _
    // Predicated region
    $region14: #{lstm_block_forward.1} parent=1 // pred_check
      _
    $region15: #{lstm_block_forward.1} parent=1 // pred_check_branch
      %29 = sbr.rel (0) target = $region17
    $region16: #{lstm_block_forward.1} parent=1 // pred_region
      _
    $region17: #{lstm_block_forward.1} parent=1 // pred_fallthru
      _
    // Predicated region
    $region18: #{lstm_block_forward.1} parent=1 // pred_check
      _
    $region19: #{lstm_block_forward.1} parent=1 // pred_check_branch
      %31 = sbr.rel (0) target = $region21
    $region20: #{lstm_block_forward.1} parent=1 // pred_region
      %32 = dma.done [#allocation3], 16384
    $region21: #{lstm_block_forward.1} parent=1 // pred_fallthru
      _
    %v33 = vld [vmem:[%s0] sm:$0xff]
    %v34 = vld [vmem:[%s0 + $0x8] sm:$0xff]
    %v35 = vld [vmem:[#allocation2] sm:$0xff]
    %v36 = vld [vmem:[#allocation2 + $0x8] sm:$0xff]
    %v37 = vld [vmem:[#allocation2 + $0x10] sm:$0xff]
    %v38 = vld [vmem:[#allocation2 + $0x18] sm:$0xff]
    %v39 = vld [vmem:[#allocation2 + $0x20] sm:$0xff]
    %v40 = vld [vmem:[#allocation2 + $0x28] sm:$0xff]
    %v41 = vld [vmem:[#allocation2 + $0x30] sm:$0xff]
    %v42 = vld [vmem:[#allocation2 + $0x38] sm:$0xff]
    %v43 = vld [vmem:[#allocation2 + $0x40] sm:$0xff]
    %v44 = vld [vmem:[#allocation2 + $0x48] sm:$0xff]
    %v45 = vld [vmem:[#allocation2 + $0x50] sm:$0xff]
    %v46 = vld [vmem:[#allocation2 + $0x58] sm:$0xff]
    %v47 = vld [vmem:[#allocation2 + $0x60] sm:$0xff]
    %v48 = vld [vmem:[#allocation2 + $0x68] sm:$0xff]
    %v49 = vld [vmem:[#allocation2 + $0x70] sm:$0xff]
    %v50 = vld [vmem:[#allocation2 + $0x78] sm:$0xff]
    %v51 = vld [vmem:[#allocation2 + $0x80] sm:$0xff]
    %v52 = vld [vmem:[#allocation2 + $0x88] sm:$0xff]
    %v53 = vld [vmem:[#allocation2 + $0x90] sm:$0xff]
    %v54 = vld [vmem:[#allocation2 + $0x98] sm:$0xff]
    %v55 = vld [vmem:[#allocation2 + $0xa0] sm:$0xff]
    %v56 = vld [vmem:[#allocation2 + $0xa8] sm:$0xff]
    %v57 = vld [vmem:[#allocation2 + $0xb0] sm:$0xff]
    %v58 = vld [vmem:[#allocation2 + $0xb8] sm:$0xff]
    %v59 = vld [vmem:[#allocation2 + $0xc0] sm:$0xff]
    %v60 = vld [vmem:[#allocation2 + $0xc8] sm:$0xff]
    %v61 = vld [vmem:[#allocation2 + $0xd0] sm:$0xff]
    %v62 = vld [vmem:[#allocation2 + $0xd8] sm:$0xff]
    %v63 = vld [vmem:[#allocation2 + $0xe0] sm:$0xff]
    %v64 = vld [vmem:[#allocation2 + $0xe8] sm:$0xff]
    %v65 = vld [vmem:[#allocation2 + $0xf0] sm:$0xff]
    %v66 = vld [vmem:[#allocation2 + $0xf8] sm:$0xff]
    %v67 = vld [vmem:[#allocation2 + $0x100] sm:$0xff]
    %v68 = vld [vmem:[#allocation2 + $0x108] sm:$0xff]
    %v69 = vld [vmem:[#allocation2 + $0x110] sm:$0xff]
    %v70 = vld [vmem:[#allocation2 + $0x118] sm:$0xff]
    %v71 = vld [vmem:[#allocation2 + $0x120] sm:$0xff]
    %v72 = vld [vmem:[#allocation2 + $0x128] sm:$0xff]
    %v73 = vld [vmem:[#allocation2 + $0x130] sm:$0xff]
    %v74 = vld [vmem:[#allocation2 + $0x138] sm:$0xff]
    %v75 = vld [vmem:[#allocation2 + $0x140] sm:$0xff]
    %v76 = vld [vmem:[#allocation2 + $0x148] sm:$0xff]
    %v77 = vld [vmem:[#allocation2 + $0x150] sm:$0xff]
    %v78 = vld [vmem:[#allocation2 + $0x158] sm:$0xff]
    %v79 = vld [vmem:[#allocation2 + $0x160] sm:$0xff]
    %v80 = vld [vmem:[#allocation2 + $0x168] sm:$0xff]
    %v81 = vld [vmem:[#allocation2 + $0x170] sm:$0xff]
    %v82 = vld [vmem:[#allocation2 + $0x178] sm:$0xff]
    %v83 = vld [vmem:[#allocation2 + $0x180] sm:$0xff]
    %v84 = vld [vmem:[#allocation2 + $0x188] sm:$0xff]
    %v85 = vld [vmem:[#allocation2 + $0x190] sm:$0xff]
    %v86 = vld [vmem:[#allocation2 + $0x198] sm:$0xff]
    %v87 = vld [vmem:[#allocation2 + $0x1a0] sm:$0xff]
    %v88 = vld [vmem:[#allocation2 + $0x1a8] sm:$0xff]
    %v89 = vld [vmem:[#allocation2 + $0x1b0] sm:$0xff]
    %v90 = vld [vmem:[#allocation2 + $0x1b8] sm:$0xff]
    %v91 = vld [vmem:[#allocation2 + $0x1c0] sm:$0xff]
    %v92 = vld [vmem:[#allocation2 + $0x1c8] sm:$0xff]
    %v93 = vld [vmem:[#allocation2 + $0x1d0] sm:$0xff]
    %v94 = vld [vmem:[#allocation2 + $0x1d8] sm:$0xff]
    %v95 = vld [vmem:[#allocation2 + $0x1e0] sm:$0xff]
    %v96 = vld [vmem:[#allocation2 + $0x1e8] sm:$0xff]
    %v97 = vld [vmem:[#allocation2 + $0x1f0] sm:$0xff]
    %v98 = vld [vmem:[#allocation2 + $0x1f8] sm:$0xff]
    %v99 = vld [vmem:[#allocation2 + $0x200] sm:$0xff]
    %v100 = vld [vmem:[#allocation2 + $0x208] sm:$0xff]
    %v101 = vld [vmem:[#allocation2 + $0x210] sm:$0xff]
    %v102 = vld [vmem:[#allocation2 + $0x218] sm:$0xff]
    %v103 = vld [vmem:[#allocation2 + $0x220] sm:$0xff]
    %v104 = vld [vmem:[#allocation2 + $0x228] sm:$0xff]
    %v105 = vld [vmem:[#allocation2 + $0x230] sm:$0xff]
    %v106 = vld [vmem:[#allocation2 + $0x238] sm:$0xff]
    %v107 = vld [vmem:[#allocation2 + $0x240] sm:$0xff]
    %v108 = vld [vmem:[#allocation2 + $0x248] sm:$0xff]
    %v109 = vld [vmem:[#allocation2 + $0x250] sm:$0xff]
    %v110 = vld [vmem:[#allocation2 + $0x258] sm:$0xff]
    %v111 = vld [vmem:[#allocation2 + $0x260] sm:$0xff]
    %v112 = vld [vmem:[#allocation2 + $0x268] sm:$0xff]
    %v113 = vld [vmem:[#allocation2 + $0x270] sm:$0xff]
    %v114 = vld [vmem:[#allocation2 + $0x278] sm:$0xff]
    %v115 = vld [vmem:[#allocation2 + $0x280] sm:$0xff]
    %v116 = vld [vmem:[#allocation2 + $0x288] sm:$0xff]
    %v117 = vld [vmem:[#allocation2 + $0x290] sm:$0xff]
    %v118 = vld [vmem:[#allocation2 + $0x298] sm:$0xff]
    %v119 = vld [vmem:[#allocation2 + $0x2a0] sm:$0xff]
    %v120 = vld [vmem:[#allocation2 + $0x2a8] sm:$0xff]
    %v121 = vld [vmem:[#allocation2 + $0x2b0] sm:$0xff]
    %v122 = vld [vmem:[#allocation2 + $0x2b8] sm:$0xff]
    %v123 = vld [vmem:[#allocation2 + $0x2c0] sm:$0xff]
    %v124 = vld [vmem:[#allocation2 + $0x2c8] sm:$0xff]
    %v125 = vld [vmem:[#allocation2 + $0x2d0] sm:$0xff]
    %v126 = vld [vmem:[#allocation2 + $0x2d8] sm:$0xff]
    %v127 = vld [vmem:[#allocation2 + $0x2e0] sm:$0xff]
    %v128 = vld [vmem:[#allocation2 + $0x2e8] sm:$0xff]
    %v129 = vld [vmem:[#allocation2 + $0x2f0] sm:$0xff]
    %v130 = vld [vmem:[#allocation2 + $0x2f8] sm:$0xff]
    %v131 = vld [vmem:[#allocation2 + $0x300] sm:$0xff]
    %v132 = vld [vmem:[#allocation2 + $0x308] sm:$0xff]
    %v133 = vld [vmem:[#allocation2 + $0x310] sm:$0xff]
    %v134 = vld [vmem:[#allocation2 + $0x318] sm:$0xff]
    %v135 = vld [vmem:[#allocation2 + $0x320] sm:$0xff]
    %v136 = vld [vmem:[#allocation2 + $0x328] sm:$0xff]
    %v137 = vld [vmem:[#allocation2 + $0x330] sm:$0xff]
    %v138 = vld [vmem:[#allocation2 + $0x338] sm:$0xff]
    %v139 = vld [vmem:[#allocation2 + $0x340] sm:$0xff]
    %v140 = vld [vmem:[#allocation2 + $0x348] sm:$0xff]
    %v141 = vld [vmem:[#allocation2 + $0x350] sm:$0xff]
    %v142 = vld [vmem:[#allocation2 + $0x358] sm:$0xff]
    %v143 = vld [vmem:[#allocation2 + $0x360] sm:$0xff]
    %v144 = vld [vmem:[#allocation2 + $0x368] sm:$0xff]
    %v145 = vld [vmem:[#allocation2 + $0x370] sm:$0xff]
    %v146 = vld [vmem:[#allocation2 + $0x378] sm:$0xff]
    %v147 = vld [vmem:[#allocation2 + $0x380] sm:$0xff]
    %v148 = vld [vmem:[#allocation2 + $0x388] sm:$0xff]
    %v149 = vld [vmem:[#allocation2 + $0x390] sm:$0xff]
    %v150 = vld [vmem:[#allocation2 + $0x398] sm:$0xff]
    %v151 = vld [vmem:[#allocation2 + $0x3a0] sm:$0xff]
    %v152 = vld [vmem:[#allocation2 + $0x3a8] sm:$0xff]
    %v153 = vld [vmem:[#allocation2 + $0x3b0] sm:$0xff]
    %v154 = vld [vmem:[#allocation2 + $0x3b8] sm:$0xff]
    %v155 = vld [vmem:[#allocation2 + $0x3c0] sm:$0xff]
    %v156 = vld [vmem:[#allocation2 + $0x3c8] sm:$0xff]
    %v157 = vld [vmem:[#allocation2 + $0x3d0] sm:$0xff]
    %v158 = vld [vmem:[#allocation2 + $0x3d8] sm:$0xff]
    %v159 = vld [vmem:[#allocation2 + $0x3e0] sm:$0xff]
    %v160 = vld [vmem:[#allocation2 + $0x3e8] sm:$0xff]
    %v161 = vld [vmem:[#allocation2 + $0x3f0] sm:$0xff]
    %v162 = vld [vmem:[#allocation2 + $0x3f8] sm:$0xff]
    %v163 = vld [vmem:[%s2] sm:$0xf]
    %v165 = vlaneseq
    %v166 = vshrl.u32 %v165, 7
    %v167 = vsub.s32 0, %v166
    %v168 = vrot.slane %v163, %v167
    %v169 = vlaneseq
    %v170 = vshrl.u32 %v169, 7
    %v171 = vsub.s32 1, %v170
    %v172 = vrot.slane %v163, %v171
    %v173 = vlaneseq
    %v174 = vshrl.u32 %v173, 7
    %v175 = vsub.s32 2, %v174
    %v176 = vrot.slane %v163, %v175
    %v177 = vlaneseq
    %v178 = vshrl.u32 %v177, 7
    %v179 = vsub.s32 3, %v178
    %v180 = vrot.slane %v163, %v179
    %185 = vmatprep.subr.mxu0 %v36
    %186 = vmatpush1.msra.mxu0 %v35
    %187 = vmatprep.subr.mxu0 %v40
    %188 = vmatpush1.msra.mxu0 %v39
    %189 = vmatprep.subr.mxu0 %v44
    %190 = vmatpush1.msra.mxu0 %v43
    %191 = vmatprep.subr.mxu0 %v48
    %192 = vmatpush1.msra.mxu0 %v47
    %193 = vmatprep.subr.mxu0 %v52
    %194 = vmatpush1.msra.mxu0 %v51
    %195 = vmatprep.subr.mxu0 %v56
    %196 = vmatpush1.msra.mxu0 %v55
    %197 = vmatprep.subr.mxu0 %v60
    %198 = vmatpush1.msra.mxu0 %v59
    %199 = vmatprep.subr.mxu0 %v64
    %200 = vmatpush1.msra.mxu0 %v63
    %201 = vmatprep.subr.mxu0 %v68
    %202 = vmatpush1.msra.mxu0 %v67
    %203 = vmatprep.subr.mxu0 %v72
    %204 = vmatpush1.msra.mxu0 %v71
    %205 = vmatprep.subr.mxu0 %v76
    %206 = vmatpush1.msra.mxu0 %v75
    %207 = vmatprep.subr.mxu0 %v80
    %208 = vmatpush1.msra.mxu0 %v79
    %209 = vmatprep.subr.mxu0 %v84
    %210 = vmatpush1.msra.mxu0 %v83
    %211 = vmatprep.subr.mxu0 %v88
    %212 = vmatpush1.msra.mxu0 %v87
    %213 = vmatprep.subr.mxu0 %v92
    %214 = vmatpush1.msra.mxu0 %v91
    %215 = vmatprep.subr.mxu0 %v96
    %216 = vmatpush1.msra.mxu0 %v95
    %217 = vmatprep.subr.mxu0 %v100
    %218 = vmatpush1.msra.mxu0 %v99
    %219 = vmatprep.subr.mxu0 %v104
    %220 = vmatpush1.msra.mxu0 %v103
    %221 = vmatprep.subr.mxu0 %v108
    %222 = vmatpush1.msra.mxu0 %v107
    %223 = vmatprep.subr.mxu0 %v112
    %224 = vmatpush1.msra.mxu0 %v111
    %225 = vmatprep.subr.mxu0 %v116
    %226 = vmatpush1.msra.mxu0 %v115
    %227 = vmatprep.subr.mxu0 %v120
    %228 = vmatpush1.msra.mxu0 %v119
    %229 = vmatprep.subr.mxu0 %v124
    %230 = vmatpush1.msra.mxu0 %v123
    %231 = vmatprep.subr.mxu0 %v128
    %232 = vmatpush1.msra.mxu0 %v127
    %233 = vmatprep.subr.mxu0 %v132
    %234 = vmatpush1.msra.mxu0 %v131
    %235 = vmatprep.subr.mxu0 %v136
    %236 = vmatpush1.msra.mxu0 %v135
    %237 = vmatprep.subr.mxu0 %v140
    %238 = vmatpush1.msra.mxu0 %v139
    %239 = vmatprep.subr.mxu0 %v144
    %240 = vmatpush1.msra.mxu0 %v143
    %241 = vmatprep.subr.mxu0 %v148
    %242 = vmatpush1.msra.mxu0 %v147
    %243 = vmatprep.subr.mxu0 %v152
    %244 = vmatpush1.msra.mxu0 %v151
    %245 = vmatprep.subr.mxu0 %v156
    %246 = vmatpush1.msra.mxu0 %v155
    %247 = vmatprep.subr.mxu0 %v160
    %248 = vmatpush1.msra.mxu0 %v159
    %249 = vmatprep.mubr.f32.mxu0 %v34
    %250 = vmatmul.mubr.f32.gmra.mrb[0].mxu0 %v33
    %v251 = vpop.f32.mrb[0].mxu0
    %v252 = vadd.f32 %v168, %v251
    %v253 = vpop.f32.mrb[0].mxu0
    %v254 = vadd.f32 %v172, %v253
    %255 = vdwg.mxu0
    %256 = vmatprep.subr.mxu0 %v38
    %257 = vmatpush1.msra.mxu0 %v37
    %258 = vmatprep.subr.mxu0 %v42
    %259 = vmatpush1.msra.mxu0 %v41
    %260 = vmatprep.subr.mxu0 %v46
    %261 = vmatpush1.msra.mxu0 %v45
    %262 = vmatprep.subr.mxu0 %v50
    %263 = vmatpush1.msra.mxu0 %v49
    %264 = vmatprep.subr.mxu0 %v54
    %265 = vmatpush1.msra.mxu0 %v53
    %266 = vmatprep.subr.mxu0 %v58
    %267 = vmatpush1.msra.mxu0 %v57
    %268 = vmatprep.subr.mxu0 %v62
    %269 = vmatpush1.msra.mxu0 %v61
    %270 = vmatprep.subr.mxu0 %v66
    %271 = vmatpush1.msra.mxu0 %v65
    %272 = vmatprep.subr.mxu0 %v70
    %273 = vmatpush1.msra.mxu0 %v69
    %274 = vmatprep.subr.mxu0 %v74
    %275 = vmatpush1.msra.mxu0 %v73
    %276 = vmatprep.subr.mxu0 %v78
    %277 = vmatpush1.msra.mxu0 %v77
    %278 = vmatprep.subr.mxu0 %v82
    %279 = vmatpush1.msra.mxu0 %v81
    %280 = vmatprep.subr.mxu0 %v86
    %281 = vmatpush1.msra.mxu0 %v85
    %282 = vmatprep.subr.mxu0 %v90
    %283 = vmatpush1.msra.mxu0 %v89
    %284 = vmatprep.subr.mxu0 %v94
    %285 = vmatpush1.msra.mxu0 %v93
    %286 = vmatprep.subr.mxu0 %v98
    %287 = vmatpush1.msra.mxu0 %v97
    %288 = vmatprep.subr.mxu0 %v102
    %289 = vmatpush1.msra.mxu0 %v101
    %290 = vmatprep.subr.mxu0 %v106
    %291 = vmatpush1.msra.mxu0 %v105
    %292 = vmatprep.subr.mxu0 %v110
    %293 = vmatpush1.msra.mxu0 %v109
    %294 = vmatprep.subr.mxu0 %v114
    %295 = vmatpush1.msra.mxu0 %v113
    %296 = vmatprep.subr.mxu0 %v118
    %297 = vmatpush1.msra.mxu0 %v117
    %298 = vmatprep.subr.mxu0 %v122
    %299 = vmatpush1.msra.mxu0 %v121
    %300 = vmatprep.subr.mxu0 %v126
    %301 = vmatpush1.msra.mxu0 %v125
    %302 = vmatprep.subr.mxu0 %v130
    %303 = vmatpush1.msra.mxu0 %v129
    %304 = vmatprep.subr.mxu0 %v134
    %305 = vmatpush1.msra.mxu0 %v133
    %306 = vmatprep.subr.mxu0 %v138
    %307 = vmatpush1.msra.mxu0 %v137
    %308 = vmatprep.subr.mxu0 %v142
    %309 = vmatpush1.msra.mxu0 %v141
    %310 = vmatprep.subr.mxu0 %v146
    %311 = vmatpush1.msra.mxu0 %v145
    %312 = vmatprep.subr.mxu0 %v150
    %313 = vmatpush1.msra.mxu0 %v149
    %314 = vmatprep.subr.mxu0 %v154
    %315 = vmatpush1.msra.mxu0 %v153
    %316 = vmatprep.subr.mxu0 %v158
    %317 = vmatpush1.msra.mxu0 %v157
    %318 = vmatprep.subr.mxu0 %v162
    %319 = vmatpush1.msra.mxu0 %v161
    %320 = vmatprep.mubr.f32.mxu0 %v34
    %321 = vmatmul.mubr.f32.gmra.mrb[0].mxu0 %v33
    %v322 = vpop.f32.mrb[0].mxu0
    %v323 = vadd.f32 %v176, %v322
    %v324 = vpop.f32.mrb[0].mxu0
    %v325 = vadd.f32 %v180, %v324
    %326 = vdwg.mxu0
    %v327 = vxor.u32 %v252, 2147483648
    %v328 = vmul.f32 %v327, 1.442695
    %v329 = vpow.pop %v328
    %v330 = vadd.f32 %v329, 1.0
    %v331 = vrcp.pop %v330
    %v332 = vmul.f32 1.0, %v331
    %v333 = vxor.u32 %v254, 2147483648
    %v334 = vmul.f32 %v333, 1.442695
    %v335 = vpow.pop %v334
    %v336 = vadd.f32 %v335, 1.0
    %v337 = vrcp.pop %v336
    %v338 = vmul.f32 1.0, %v337
    %v339 = vtanh.pop %v323
    %v340 = vxor.u32 %v325, 2147483648
    %v341 = vmul.f32 %v340, 1.442695
    %v342 = vpow.pop %v341
    %v343 = vadd.f32 %v342, 1.0
    %v344 = vrcp.pop %v343
    %v345 = vmul.f32 1.0, %v344
    %v346 = vld [vmem:[%s3] sm:$0xff]
    %v347 = vmul.f32 %v338, %v346
    %v348 = vmul.f32 %v332, %v339
    %v349 = vadd.f32 %v347, %v348
    %v350 = vtanh.pop %v349
    %v351 = vmul.f32 %v345, %v350
    %352 = vst [vmem:[%s4] sm:$0xff] %v351
    %353 = vst [vmem:[%s5] sm:$0xff] %v349
    // Predicated region
    $region22: #{lstm_block_forward.1} parent=1 // pred_check
      _
    $region23: #{lstm_block_forward.1} parent=1 // pred_check_branch
      %355 = sbr.rel (0) target = $region25
    $region24: #{lstm_block_forward.1} parent=1 // pred_region
      _
    $region25: #{lstm_block_forward.1} parent=1 // pred_fallthru
      _
    // Predicated region
    $region26: #{lstm_block_forward.1} parent=1 // pred_check
      _
    $region27: #{lstm_block_forward.1} parent=1 // pred_check_branch
      %357 = sbr.rel (0) target = $region29
    $region28: #{lstm_block_forward.1} parent=1 // pred_region
      _
    $region29: #{lstm_block_forward.1} parent=1 // pred_fallthru
      _
    // Predicated region
    $region30: #{lstm_block_forward.1} parent=1 // pred_check
      _
    $region31: #{lstm_block_forward.1} parent=1 // pred_check_branch
      %359 = sbr.rel (0) target = $region33
    $region32: #{lstm_block_forward.1} parent=1 // pred_region
      _
    $region33: #{lstm_block_forward.1} parent=1 // pred_fallthru
      _
    // Predicated region
    $region34: #{lstm_block_forward.1} parent=1 // pred_check
      _
    $region35: #{lstm_block_forward.1} parent=1 // pred_check_branch
      %361 = sbr.rel (0) target = $region37
    $region36: #{lstm_block_forward.1} parent=1 // pred_region
      _
    $region37: #{lstm_block_forward.1} parent=1 // pred_fallthru
      _
    %362 = vsyncpa [#allocation3], 1

</llo_original>
